<compile_context>
chip_gen: v7x
topology: tpu7x:2x2x1
jax: 0.10.0
libtpu: 0.0.40
codegen_flags: <defaults>
</compile_context>

<pallas_src>
from functools import partial

import jax
import jax.numpy as jnp
from jax.experimental import pallas as pl
from jax.experimental.pallas import tpu as pltpu


def _round_up(x: int, m: int) -> int:
    return (x + m - 1) // m * m


def _batch_hard_triplet_kernel(a_sq_ref, b_sq_ref, row_lab_ref, col_lab_ref,
                               e_row_ref, e_col_ref, out_ref, *,
                               n_valid, n_total, margin, squared, eps):
    i = pl.program_id(0)
    j = pl.program_id(1)
    tm = a_sq_ref.shape[0]
    tn = b_sq_ref.shape[1]

    # The output block is resident across the column ("arbitrary") axis and is
    # used directly as the running row-max accumulator.
    @pl.when(j == 0)
    def _init():
        out_ref[...] = jnp.zeros_like(out_ref)

    # Gram tile on the MXU: contract the feature dim of both operands directly
    # (no transpose of either tile is materialized); f32 accumulation.
    ab = jax.lax.dot_general(
        e_row_ref[...], e_col_ref[...],
        dimension_numbers=(((1,), (1,)), ((), ())),
        preferred_element_type=jnp.float32)                     # (tm, tn) f32

    # Squared distances, relu'd like the reference.
    d2 = jnp.maximum(a_sq_ref[...] - 2.0 * ab + b_sq_ref[...], 0.0)

    row_g = i * tm + jax.lax.broadcasted_iota(jnp.int32, (tm, 1), 0)
    col_g = j * tn + jax.lax.broadcasted_iota(jnp.int32, (1, tn), 1)

    # Positive mask: same label AND not the self pair.  Excluding the diagonal
    # is exact for dist_ap: the reference's diagonal distance cancels to
    # exactly 0, which can never beat the 0 fill used below.
    is_pos = jnp.logical_and(row_lab_ref[...] == col_lab_ref[...],
                             row_g != col_g)
    if n_total != n_valid:                      # padded columns (static check)
        is_pos = jnp.logical_and(is_pos, col_g < n_valid)

    # where(mask, d, 0) == dist * mask for non-negative d -> exact reference
    # max semantics without bool->f32 casts.
    tile_max = jnp.max(jnp.where(is_pos, d2, 0.0), axis=1, keepdims=True)
    out_ref[...] = jnp.maximum(out_ref[...], tile_max)

    @pl.when(j == pl.num_programs(1) - 1)
    def _finalize():
        dist_ap = out_ref[...]
        if not squared:
            # sqrt deferred past the max (monotone => exact); +eps deferred
            # off the N^2 matrix (the 0 fill becomes sqrt(eps), matching the
            # reference's self-pair distance for rows with no other positive).
            dist_ap = jnp.sqrt(dist_ap + eps)
        # dist_an in the reference is identically 0: is_neg is False on the
        # diagonal, so every row of `dist_mat * is_neg` contains a 0 and all
        # entries are >= 0, hence the row min is 0.  The hard-negative term is
        # dead code in the spec; the loss is exactly relu(dist_ap + margin).
        out_ref[...] = jnp.maximum(dist_ap + margin, 0.0)


def batch_hard_triplet_loss(embeddings, labels, *, margin=1.0, squared=False,
                            agg='sum', eps=1e-08, tile_m=256, tile_n=512):
    """Forward pass of BatchHardTripletLoss.

    NOTE: the reference forward() always uses .sum() regardless of `agg`; the
    argument is accepted for API parity but ignored, matching the spec.
    """
    assert tile_m % 8 == 0 and tile_n % 128 == 0 and tile_n % tile_m == 0
    n, d = embeddings.shape

    # Tile selection.  Only N is padded (the feature dim is taken at full
    # extent per block, so no D pad / extra HBM round-trip is needed):
    #   * small batches: single block (tm == tn == n_pad, 8-aligned).
    #   * medium: one column tile (tn == n_pad), row-tiled.
    #   * large: tile both axes; tn is a multiple of 128 and divides n_pad.
    if n <= tile_m:
        n_pad = _round_up(n, 8)
        tm = tn = n_pad
    elif n <= tile_n:
        n_pad = _round_up(n, tile_m)
        tm, tn = tile_m, n_pad
    else:
        n_pad = _round_up(n, tile_n)
        tm, tn = tile_m, tile_n

    emb = embeddings
    lab = labels.astype(jnp.int32)
    if n_pad != n:
        emb = jnp.pad(emb, ((0, n_pad - n), (0, 0)))
        lab = jnp.pad(lab, (0, n_pad - n))

    # Squared norms hoisted out of the kernel: computed once, O(N*D), reused
    # across every row tile instead of being recomputed per tile.
    sq = jnp.sum(jnp.square(emb.astype(jnp.float32)), axis=1)   # (n_pad,)
    a_sq = sq.reshape(n_pad, 1)
    b_sq = sq.reshape(1, n_pad)
    # Labels shipped in both layouts (tiny: 8*n_pad bytes) to avoid an
    # in-kernel sublane<->lane layout change of a (1, tm) slice.
    lab_col = lab.reshape(n_pad, 1)
    lab_row = lab.reshape(1, n_pad)

    grid = (n_pad // tm, n_pad // tn)

    kernel = partial(_batch_hard_triplet_kernel,
                     n_valid=n, n_total=n_pad,
                     margin=float(margin), squared=bool(squared),
                     eps=float(eps))

    cost = pl.CostEstimate(
        flops=int(2 * n_pad * n_pad * d + 8 * n_pad * n_pad),
        transcendentals=0 if squared else int(n_pad),
        bytes_accessed=int(emb.dtype.itemsize * n_pad * d * (1 + grid[0])
                           + 4 * 4 * n_pad + 4 * n_pad))

    out = pl.pallas_call(
        kernel,
        out_shape=jax.ShapeDtypeStruct((n_pad, 1), jnp.float32),
        grid_spec=pltpu.PrefetchScalarGridSpec(
            num_scalar_prefetch=0,
            grid=grid,
            in_specs=[
                pl.BlockSpec((tm, 1), lambda i, j: (i, 0)),   # a_sq (row norms)
                pl.BlockSpec((1, tn), lambda i, j: (0, j)),   # b_sq (col norms)
                pl.BlockSpec((tm, 1), lambda i, j: (i, 0)),   # row-tile labels
                pl.BlockSpec((1, tn), lambda i, j: (0, j)),   # col-tile labels
                pl.BlockSpec((tm, d), lambda i, j: (i, 0)),   # row embeddings
                pl.BlockSpec((tn, d), lambda i, j: (j, 0)),   # col embeddings
            ],
            out_specs=pl.BlockSpec((tm, 1), lambda i, j: (i, 0)),
        ),
        compiler_params=pltpu.CompilerParams(
            dimension_semantics=("parallel", "arbitrary")),
        cost_estimate=cost,
    )(a_sq, b_sq, lab_col, lab_row, emb, emb)

    # Padded rows are simply discarded; per-row losses summed in the wrapper
    # (keeps the row grid axis shardable across v7x's two TensorCores).
    return jnp.sum(out[:n, 0])


def _reference_loss(embeddings, labels, *, margin=1.0, squared=False, eps=1e-08):
    # Pure-JAX mirror of the PyTorch module, used only for a sanity check.
    e = embeddings.astype(jnp.float32)
    ab = e @ e.T
    a_sq = jnp.diag(ab)[:, None]
    b_sq = jnp.diag(ab)[None, :]
    dist = jnp.maximum(a_sq - 2.0 * ab + b_sq, 0.0)
    if not squared:
        dist = jnp.sqrt(dist + eps)
    is_pos = (labels[:, None] == labels[None, :]).astype(jnp.float32)
    is_neg = (labels[:, None] != labels[None, :]).astype(jnp.float32)
    dist_ap = jnp.max(dist * is_pos, axis=1, keepdims=True)
    dist_an = jnp.min(dist * is_neg, axis=1, keepdims=True)
    return jnp.sum(jnp.maximum(dist_ap - dist_an + margin, 0.0))


if __name__ == "__main__":
    key = jax.random.PRNGKey(0)
    k1, k2, k3, k4 = jax.random.split(key, 4)

    # Small case (single block, block_shape == full array dims).
    N, D = 8, 32
    emb = jax.random.normal(k1, (N, D), dtype=jnp.float32)
    lab = jax.random.randint(k2, (N,), 0, 4, dtype=jnp.int32)

    loss = jax.block_until_ready(
        batch_hard_triplet_loss(emb, lab, margin=1.0, squared=False))
    ref = jax.block_until_ready(
        _reference_loss(emb, lab, margin=1.0, squared=False))
    assert jnp.allclose(loss, ref, rtol=1e-5, atol=1e-4), (loss, ref)

    loss_sq = jax.block_until_ready(
        batch_hard_triplet_loss(emb, lab, margin=1.0, squared=True))
    ref_sq = jax.block_until_ready(
        _reference_loss(emb, lab, margin=1.0, squared=True))
    assert jnp.allclose(loss_sq, ref_sq, rtol=1e-5, atol=1e-4), (loss_sq, ref_sq)

    # Larger ragged case exercising row/column tiling, the online max
    # accumulator and the padded-column mask (small tiles to keep it cheap).
    N2, D2 = 300, 96
    emb2 = jax.random.normal(k3, (N2, D2), dtype=jnp.float32)
    lab2 = jax.random.randint(k4, (N2,), 0, 10, dtype=jnp.int32)
    loss2 = jax.block_until_ready(
        batch_hard_triplet_loss(emb2, lab2, margin=1.0, squared=False,
                                tile_m=64, tile_n=128))
    ref2 = jax.block_until_ready(
        _reference_loss(emb2, lab2, margin=1.0, squared=False))
    assert jnp.allclose(loss2, ref2, rtol=1e-4, atol=1e-3), (loss2, ref2)

    print("KERNEL_OK")
</pallas_src>

<mosaic_0001>
module attributes {stable_mosaic.version = 11 : i64} {
  func.func @_batch_hard_triplet_kernel(%arg0: i32, %arg1: i32, %arg2: memref<8x1xf32, #tpu.memory_space<vmem>>, %arg3: memref<1x8xf32, #tpu.memory_space<vmem>>, %arg4: memref<8x1xi32, #tpu.memory_space<vmem>>, %arg5: memref<1x8xi32, #tpu.memory_space<vmem>>, %arg6: memref<8x32xf32, #tpu.memory_space<vmem>>, %arg7: memref<8x32xf32, #tpu.memory_space<vmem>>, %arg8: memref<8x1xf32, #tpu.memory_space<vmem>>) attributes {dimension_semantics = [#tpu.dimension_semantics<parallel>, #tpu.dimension_semantics<arbitrary>], iteration_bounds = array<i64: 1, 1>, scalar_prefetch = 0 : i64, scratch_operands = 0 : i64, tpu.core_type = #tpu.core_type<tc>, window_params = [{transform_indices = @transform_0, window_bounds = array<i64: 8, 1>}, {transform_indices = @transform_1, window_bounds = array<i64: 1, 8>}, {transform_indices = @transform_2, window_bounds = array<i64: 8, 1>}, {transform_indices = @transform_3, window_bounds = array<i64: 1, 8>}, {transform_indices = @transform_4, window_bounds = array<i64: 8, 32>}, {transform_indices = @transform_5, window_bounds = array<i64: 8, 32>}, {transform_indices = @transform_6, window_bounds = array<i64: 8, 1>}]} {
    %c0_i32 = arith.constant 0 : i32
    %0 = arith.cmpi eq, %arg1, %c0_i32 : i32
    %1 = arith.extui %0 : i1 to i32
    %c0_i32_0 = arith.constant 0 : i32
    %2 = arith.cmpi ne, %1, %c0_i32_0 : i32
    scf.if %2 {
      %cst_23 = arith.constant 0.000000e+00 : f32
      %43 = vector.broadcast %cst_23 : f32 to vector<8x1xf32>
      %c0_24 = arith.constant 0 : index
      %c0_25 = arith.constant 0 : index
      %44 = vector.load %arg8[%c0_24, %c0_25] : memref<8x1xf32, #tpu.memory_space<vmem>>, vector<8x1xf32>
      tpu.vector_store %arg8[%c0_24, %c0_25], %43 {strides = array<i32>} : memref<8x1xf32, #tpu.memory_space<vmem>>, vector<8x1xf32>,
    } else {
    }
    %c0 = arith.constant 0 : index
    %c0_1 = arith.constant 0 : index
    %3 = vector.load %arg6[%c0, %c0_1] : memref<8x32xf32, #tpu.memory_space<vmem>>, vector<8x32xf32>
    %c0_2 = arith.constant 0 : index
    %c0_3 = arith.constant 0 : index
    %4 = vector.load %arg7[%c0_2, %c0_3] : memref<8x32xf32, #tpu.memory_space<vmem>>, vector<8x32xf32>
    %cst = arith.constant dense<0.000000e+00> : vector<8x8xf32>
    %5 = tpu.matmul %3, %4, %cst {dimension_numbers = #tpu.dot_dimension_numbers<[1], [1], [0], [0], [0, 0, 1, 0], [], []>} : vector<8x32xf32>, vector<8x32xf32>, vector<8x8xf32> -> vector<8x8xf32>
    %c0_4 = arith.constant 0 : index
    %c0_5 = arith.constant 0 : index
    %6 = vector.load %arg2[%c0_4, %c0_5] : memref<8x1xf32, #tpu.memory_space<vmem>>, vector<8x1xf32>
    %cst_6 = arith.constant 2.000000e+00 : f32
    %7 = vector.broadcast %cst_6 : f32 to vector<8x8xf32>
    %8 = arith.mulf %7, %5 : vector<8x8xf32>
    %9 = vector.broadcast %6 : vector<8x1xf32> to vector<8x8xf32>
    %10 = arith.subf %9, %8 : vector<8x8xf32>
    %c0_7 = arith.constant 0 : index
    %c0_8 = arith.constant 0 : index
    %11 = vector.load %arg3[%c0_7, %c0_8] : memref<1x8xf32, #tpu.memory_space<vmem>>, vector<1x8xf32>
    %12 = vector.broadcast %11 : vector<1x8xf32> to vector<8x8xf32>
    %13 = arith.addf %10, %12 : vector<8x8xf32>
    %cst_9 = arith.constant 0.000000e+00 : f32
    %14 = vector.broadcast %cst_9 : f32 to vector<8x8xf32>
    %15 = arith.maximumf %13, %14 : vector<8x8xf32>
    %c8_i32 = arith.constant 8 : i32
    %16 = arith.muli %arg0, %c8_i32 : i32
    %17 = tpu.iota {dimensions = array<i32: 0>} : vector<8x1xi32>
    %18 = vector.broadcast %16 : i32 to vector<8x1xi32>
    %19 = arith.addi %18, %17 : vector<8x1xi32>
    %c8_i32_10 = arith.constant 8 : i32
    %20 = arith.muli %arg1, %c8_i32_10 : i32
    %21 = tpu.iota {dimensions = array<i32: 1>} : vector<1x8xi32>
    %22 = vector.broadcast %20 : i32 to vector<1x8xi32>
    %23 = arith.addi %22, %21 : vector<1x8xi32>
    %c0_11 = arith.constant 0 : index
    %c0_12 = arith.constant 0 : index
    %24 = vector.load %arg4[%c0_11, %c0_12] : memref<8x1xi32, #tpu.memory_space<vmem>>, vector<8x1xi32>
    %c0_13 = arith.constant 0 : index
    %c0_14 = arith.constant 0 : index
    %25 = vector.load %arg5[%c0_13, %c0_14] : memref<1x8xi32, #tpu.memory_space<vmem>>, vector<1x8xi32>
    %26 = vector.broadcast %24 : vector<8x1xi32> to vector<8x8xi32>
    %27 = vector.broadcast %25 : vector<1x8xi32> to vector<8x8xi32>
    %28 = arith.cmpi eq, %26, %27 : vector<8x8xi32>
    %29 = vector.broadcast %19 : vector<8x1xi32> to vector<8x8xi32>
    %30 = vector.broadcast %23 : vector<1x8xi32> to vector<8x8xi32>
    %31 = arith.cmpi ne, %29, %30 : vector<8x8xi32>
    %32 = arith.andi %28, %31 : vector<8x8xi1>
    %cst_15 = arith.constant 0.000000e+00 : f32
    %33 = vector.broadcast %cst_15 : f32 to vector<8x8xf32>
    %34 = arith.select %32, %15, %33 : vector<8x8xi1>, vector<8x8xf32>
    %cst_16 = arith.constant dense<0xFF800000> : vector<8xf32>
    %35 = vector.multi_reduction <maximumf>, %34, %cst_16 [1] : vector<8x8xf32> to vector<8xf32>
    %36 = vector.shape_cast %35 : vector<8xf32> to vector<8x1xf32>
    %c0_17 = arith.constant 0 : index
    %c0_18 = arith.constant 0 : index
    %37 = vector.load %arg8[%c0_17, %c0_18] : memref<8x1xf32, #tpu.memory_space<vmem>>, vector<8x1xf32>
    %38 = arith.maximumf %37, %36 : vector<8x1xf32>
    %c0_19 = arith.constant 0 : index
    %c0_20 = arith.constant 0 : index
    %39 = vector.load %arg8[%c0_19, %c0_20] : memref<8x1xf32, #tpu.memory_space<vmem>>, vector<8x1xf32>
    tpu.vector_store %arg8[%c0_19, %c0_20], %38 {strides = array<i32>} : memref<8x1xf32, #tpu.memory_space<vmem>>, vector<8x1xf32>,
    %c0_i32_21 = arith.constant 0 : i32
    %40 = arith.cmpi eq, %arg1, %c0_i32_21 : i32
    %41 = arith.extui %40 : i1 to i32
    %c0_i32_22 = arith.constant 0 : i32
    %42 = arith.cmpi ne, %41, %c0_i32_22 : i32
    scf.if %42 {
      %c0_23 = arith.constant 0 : index
      %c0_24 = arith.constant 0 : index
      %43 = vector.load %arg8[%c0_23, %c0_24] : memref<8x1xf32, #tpu.memory_space<vmem>>, vector<8x1xf32>
      %cst_25 = arith.constant 9.99999993E-9 : f32
      %44 = vector.broadcast %cst_25 : f32 to vector<8x1xf32>
      %45 = arith.addf %43, %44 : vector<8x1xf32>
      %46 = math.sqrt %45 : vector<8x1xf32>
      %cst_26 = arith.constant 1.000000e+00 : f32
      %47 = vector.broadcast %cst_26 : f32 to vector<8x1xf32>
      %48 = arith.addf %46, %47 : vector<8x1xf32>
      %cst_27 = arith.constant 0.000000e+00 : f32
      %49 = vector.broadcast %cst_27 : f32 to vector<8x1xf32>
      %50 = arith.maximumf %48, %49 : vector<8x1xf32>
      %c0_28 = arith.constant 0 : index
      %c0_29 = arith.constant 0 : index
      %51 = vector.load %arg8[%c0_28, %c0_29] : memref<8x1xf32, #tpu.memory_space<vmem>>, vector<8x1xf32>
      tpu.vector_store %arg8[%c0_28, %c0_29], %50 {strides = array<i32>} : memref<8x1xf32, #tpu.memory_space<vmem>>, vector<8x1xf32>,
    } else {
    }
    return
  }
  func.func @transform_0(%arg0: i32, %arg1: i32) -> (i32, i32) {
    %c0_i32 = arith.constant 0 : i32
    %c0_i32_0 = arith.constant 0 : i32
    return %arg0, %c0_i32 : i32, i32
  }
  func.func @transform_1(%arg0: i32, %arg1: i32) -> (i32, i32) {
    %c0_i32 = arith.constant 0 : i32
    %c0_i32_0 = arith.constant 0 : i32
    return %c0_i32, %arg1 : i32, i32
  }
  func.func @transform_2(%arg0: i32, %arg1: i32) -> (i32, i32) {
    %c0_i32 = arith.constant 0 : i32
    %c0_i32_0 = arith.constant 0 : i32
    return %arg0, %c0_i32 : i32, i32
  }
  func.func @transform_3(%arg0: i32, %arg1: i32) -> (i32, i32) {
    %c0_i32 = arith.constant 0 : i32
    %c0_i32_0 = arith.constant 0 : i32
    return %c0_i32, %arg1 : i32, i32
  }
  func.func @transform_4(%arg0: i32, %arg1: i32) -> (i32, i32) {
    %c0_i32 = arith.constant 0 : i32
    %c0_i32_0 = arith.constant 0 : i32
    return %arg0, %c0_i32 : i32, i32
  }
  func.func @transform_5(%arg0: i32, %arg1: i32) -> (i32, i32) {
    %c0_i32 = arith.constant 0 : i32
    %c0_i32_0 = arith.constant 0 : i32
    return %arg1, %c0_i32 : i32, i32
  }
  func.func @transform_6(%arg0: i32, %arg1: i32) -> (i32, i32) {
    %c0_i32 = arith.constant 0 : i32
    %c0_i32_0 = arith.constant 0 : i32
    return %arg0, %c0_i32 : i32, i32
  }
}

</mosaic_0001>

<llo_original>
// kernel: tpu_custom_call.1
$region0: #{tpu_custom_call.1}
  #allocation0 [shape = 'u32[]', space=smem, size = 0x4, offset = 0x4, fixed_abs, tag = 'smem constant byte address 0x4 - core index']
  #allocation1 [shape = 'u32[144,128]{1,0:T(1,128)}', space=vmem, size = 0x12000, scoped, tag = 'internal scratch']
  %s0 = inlined_call_operand.vmem [shape: f32[8,1], index: 0, kind: input, shape index: {}]
  %s1 = inlined_call_operand.vmem [shape: f32[1,8], index: 1, kind: input, shape index: {}]
  %s2 = inlined_call_operand.vmem [shape: s32[8,1], index: 2, kind: input, shape index: {}]
  %s3 = inlined_call_operand.vmem [shape: s32[1,8], index: 3, kind: input, shape index: {}]
  %s4 = inlined_call_operand.vmem [shape: f32[8,32], index: 4, kind: input, shape index: {}]
  %s5 = inlined_call_operand.vmem [shape: f32[8,32], index: 5, kind: input, shape index: {}]
  %s6 = inlined_call_operand.vmem [shape: f32[8,1], index: 6, kind: output, shape index: {}]
  %s7 = sld [smem:[#allocation0]]
  $region42: #{tpu_custom_call.1} parent=0
    _
  %s9 = ssub.s32 1, %s7
  %s10 = scalar_select 0, %s9, %s7
  // Predicated region
  $region2: #{tpu_custom_call.1} parent=0 // pred_check
    _
  $region3: #{tpu_custom_call.1} parent=0 // pred_check_branch
    %12 = sbr.rel (0) target = $region5
  $region4: #{tpu_custom_call.1} parent=0 // pred_region
    _
  $region5: #{tpu_custom_call.1} parent=0 // pred_fallthru
    _
  // Predicated region
  $region6: #{tpu_custom_call.1} parent=0 // pred_check
    _
  $region7: #{tpu_custom_call.1} parent=0 // pred_check_branch
    %14 = sbr.rel (0) target = $region9
  $region8: #{tpu_custom_call.1} parent=0 // pred_region
    _
  $region9: #{tpu_custom_call.1} parent=0 // pred_fallthru
    _
  // Predicated region
  $region10: #{tpu_custom_call.1} parent=0 // pred_check
    _
  $region11: #{tpu_custom_call.1} parent=0 // pred_check_branch
    %16 = sbr.rel (0) target = $region13
  $region12: #{tpu_custom_call.1} parent=0 // pred_region
    _
  $region13: #{tpu_custom_call.1} parent=0 // pred_fallthru
    _
  // Predicated region
  $region14: #{tpu_custom_call.1} parent=0 // pred_check
    _
  $region15: #{tpu_custom_call.1} parent=0 // pred_check_branch
    %18 = sbr.rel (0) target = $region17
  $region16: #{tpu_custom_call.1} parent=0 // pred_region
    _
  $region17: #{tpu_custom_call.1} parent=0 // pred_fallthru
    _
  // Predicated region
  $region18: #{tpu_custom_call.1} parent=0 // pred_check
    _
  $region19: #{tpu_custom_call.1} parent=0 // pred_check_branch
    %20 = sbr.rel (0) target = $region21
  $region20: #{tpu_custom_call.1} parent=0 // pred_region
    _
  $region21: #{tpu_custom_call.1} parent=0 // pred_fallthru
    _
  // Predicated region
  $region22: #{tpu_custom_call.1} parent=0 // pred_check
    _
  $region23: #{tpu_custom_call.1} parent=0 // pred_check_branch
    %22 = sbr.rel (0) target = $region25
  $region24: #{tpu_custom_call.1} parent=0 // pred_region
    _
  $region25: #{tpu_custom_call.1} parent=0 // pred_fallthru
    _
  %p23 = scmp.eq.s32.totalorder 0, 0
  // Predicated region
  $region26: #{tpu_custom_call.1} parent=0 // pred_check
    %p24 = pneg %p23
  $region27: #{tpu_custom_call.1} parent=0 // pred_check_branch
    %26 = sbr.rel (%p24) target = $region29
  $region28: #{tpu_custom_call.1} parent=0 // pred_region
    %vm27 = vcmask 7168
    %28 = vst.msk [vmem:[%s6] sm:$0xff] %vm27, 0.0
  $region29: #{tpu_custom_call.1} parent=0 // pred_fallthru
    _
  %v29 = vld [vmem:[%s4] sm:$0xff]
  %v30 = vld [vmem:[%s5] sm:$0xff]
  %vm31 = vcmask 261120
  %v33 = vsel %vm31, %v29, 0
  %v36 = vsel %vm31, %v30, 0
  %38 = vmatprep.subr.mxu0 0.0
  %39 = vmatpush1.xpose.msra.mxu0 %v36
  %40 = vmatprep.subr.mxu0 0.0
  %41 = vmatpush1.xpose.msra.mxu0 0.0
  %42 = vmatprep.subr.mxu0 0.0
  %43 = vmatpush1.xpose.msra.mxu0 0.0
  %44 = vmatprep.subr.mxu0 0.0
  %45 = vmatpush1.xpose.msra.mxu0 0.0
  %46 = vmatprep.subr.mxu0 0.0
  %47 = vmatpush1.xpose.msra.mxu0 0.0
  %48 = vmatprep.subr.mxu0 0.0
  %49 = vmatpush1.xpose.msra.mxu0 0.0
  %50 = vmatprep.subr.mxu0 0.0
  %51 = vmatpush1.xpose.msra.mxu0 0.0
  %52 = vmatprep.subr.mxu0 0.0
  %53 = vmatpush1.xpose.msra.mxu0 0.0
  %54 = vmatprep.subr.mxu0 0.0
  %55 = vmatpush1.xpose.msra.mxu0 0.0
  %56 = vmatprep.subr.mxu0 0.0
  %57 = vmatpush1.xpose.msra.mxu0 0.0
  %58 = vmatprep.subr.mxu0 0.0
  %59 = vmatpush1.xpose.msra.mxu0 0.0
  %60 = vmatprep.subr.mxu0 0.0
  %61 = vmatpush1.xpose.msra.mxu0 0.0
  %62 = vmatprep.subr.mxu0 0.0
  %63 = vmatpush1.xpose.msra.mxu0 0.0
  %64 = vmatprep.subr.mxu0 0.0
  %65 = vmatpush1.xpose.msra.mxu0 0.0
  %66 = vmatprep.subr.mxu0 0.0
  %67 = vmatpush1.xpose.msra.mxu0 0.0
  %68 = vmatprep.subr.mxu0 0.0
  %69 = vmatpush1.xpose.msra.mxu0 0.0
  %70 = vmatprep.subr.mxu0 0.0
  %71 = vmatpush1.xpose.msra.mxu0 0.0
  %72 = vmatprep.subr.mxu0 0.0
  %73 = vmatpush1.xpose.msra.mxu0 0.0
  %74 = vmatprep.subr.mxu0 0.0
  %75 = vmatpush1.xpose.msra.mxu0 0.0
  %76 = vmatprep.subr.mxu0 0.0
  %77 = vmatpush1.xpose.msra.mxu0 0.0
  %78 = vmatprep.subr.mxu0 0.0
  %79 = vmatpush1.xpose.msra.mxu0 0.0
  %80 = vmatprep.subr.mxu0 0.0
  %81 = vmatpush1.xpose.msra.mxu0 0.0
  %82 = vmatprep.subr.mxu0 0.0
  %83 = vmatpush1.xpose.msra.mxu0 0.0
  %84 = vmatprep.subr.mxu0 0.0
  %85 = vmatpush1.xpose.msra.mxu0 0.0
  %86 = vmatprep.subr.mxu0 0.0
  %87 = vmatpush1.xpose.msra.mxu0 0.0
  %88 = vmatprep.subr.mxu0 0.0
  %89 = vmatpush1.xpose.msra.mxu0 0.0
  %90 = vmatprep.subr.mxu0 0.0
  %91 = vmatpush1.xpose.msra.mxu0 0.0
  %92 = vmatprep.subr.mxu0 0.0
  %93 = vmatpush1.xpose.msra.mxu0 0.0
  %94 = vmatprep.subr.mxu0 0.0
  %95 = vmatpush1.xpose.msra.mxu0 0.0
  %96 = vmatprep.subr.mxu0 0.0
  %97 = vmatpush1.xpose.msra.mxu0 0.0
  %98 = vmatprep.subr.mxu0 0.0
  %99 = vmatpush1.xpose.msra.mxu0 0.0
  %100 = vmatprep.subr.mxu0 0.0
  %101 = vmatpush1.xpose.msra.mxu0 0.0
  %102 = vmatprep.mubr.f32.mxu0 0.0
  %103 = vmatmul.mubr.f32.gmra.mrb[0].mxu0 %v33
  %v104 = vpop.f32.mrb[0].mxu0
  %v105 = vadd.f32 0.0, %v104
  %v106 = vpop.f32.mrb[0].mxu0
  %107 = vdwg.mxu0
  %v108 = vld [vmem:[%s0] sm:$0xff]
  %v109 = vmul.f32 %v105, 2.0
  %111 = vset.pattern.permute.xlu0 0
  %112 = vperm.xlu0 %111, %v108
  %v113 = vpop.permute.xlu0 %112
  %v115 = vsub.f32 %v113, %v109
  %v116 = vld [vmem:[%s1] sm:$0x1]
  %v118 = vlaneseq
  %v119 = vshrl.u32 %v118, 7
  %v120 = vsub.s32 0, %v119
  %v121 = vrot.slane %v116, %v120
  %v123 = vadd.f32 %v115, %v121
  %v124 = vmax.f32 %v123, 0.0
  %s125 = smul.u32 0, 8
  %v126 = vlaneseq
  %v127 = vshrl.u32 %v126, 7
  %v128 = vstv %s125
  %v129 = vadd.s32 %v128, %v127
  %s130 = smul.u32 0, 8
  %v131 = vlaneseq
  %v132 = vand.u32 %v131, 127
  %v133 = vstv %s130
  %v134 = vadd.s32 %v133, %v132
  %v135 = vld [vmem:[%s2] sm:$0xff]
  %v136 = vld [vmem:[%s3] sm:$0x1]
  %137 = vset.pattern.permute.xlu0 0
  %138 = vperm.xlu0 %137, %v135
  %v139 = vpop.permute.xlu0 %138
  %v140 = vlaneseq
  %v141 = vshrl.u32 %v140, 7
  %v142 = vsub.s32 0, %v141
  %v143 = vrot.slane %v136, %v142
  %vm144 = vcmp.eq.s32.totalorder %v139, %v143
  %vm145 = vcmp.ne.s32.totalorder %v129, %v134
  %vm146 = vmand %vm144, %vm145
  %v147 = vsel %vm146, %v124, 0.0
  %vm148 = vcmask 64512
  %v149 = vsel %vm148, %v147, -inf
  %150 = vmax.xlane.f32.xlu0 %v149
  %v151 = vpop.xlane.xlu0 %150
  %v152 = vld [vmem:[%s6] sm:$0xff]
  %v153 = vmax.f32 %v152, %v151
  %vm154 = vcmask 7168
  %155 = vst.msk [vmem:[%s6] sm:$0xff] %vm154, %v153
  // Predicated region
  $region30: #{tpu_custom_call.1} parent=0 // pred_check
    %p156 = pneg %p23
  $region31: #{tpu_custom_call.1} parent=0 // pred_check_branch
    %158 = sbr.rel (%p156) target = $region33
  $region32: #{tpu_custom_call.1} parent=0 // pred_region
    %v159 = vld [vmem:[%s6] sm:$0xff]
    %v160 = vadd.f32 %v159, 1e-08
    %v161 = vrsqrt.pop %v160
    %v162 = vmul.f32 %v160, %v161
    %vm163 = vcmp.eq.f32.partialorder %v160, inf
    %v164 = vsel %vm163, %v160, %v162
    %vm165 = vcmp.eq.f32.partialorder %v160, 0.0
    %v166 = vand.u32 %v160, 2147483648
    %v167 = vsel %vm165, %v166, %v164
    %v168 = vadd.f32 %v167, 1.0
    %v169 = vmax.f32 %v168, 0.0
    %170 = vst.msk [vmem:[%s6] sm:$0xff] %vm154, %v169
  $region33: #{tpu_custom_call.1} parent=0 // pred_fallthru
    _
  // Predicated region
  $region34: #{tpu_custom_call.1} parent=0 // pred_check
    _
  $region35: #{tpu_custom_call.1} parent=0 // pred_check_branch
    %172 = sbr.rel (0) target = $region37
  $region36: #{tpu_custom_call.1} parent=0 // pred_region
    _
  $region37: #{tpu_custom_call.1} parent=0 // pred_fallthru
    _
  // Predicated region
  $region38: #{tpu_custom_call.1} parent=0 // pred_check
    _
  $region39: #{tpu_custom_call.1} parent=0 // pred_check_branch
    %174 = sbr.rel (0) target = $region41
  $region40: #{tpu_custom_call.1} parent=0 // pred_region
    _
  $region41: #{tpu_custom_call.1} parent=0 // pred_fallthru
    _

</llo_original>
